<compile_context>
chip_gen: v5e
topology: v5e:2x2
jax: 0.10.0
libtpu: 0.0.40
codegen_flags: <defaults>
</compile_context>

<pallas_src>
import jax
import jax.numpy as jnp
from jax import lax
from jax.experimental import pallas as pl
from jax.experimental.pallas import tpu as pltpu


def _round_up(n, m):
    return (n + m - 1) // m * m


def _cdiv(a, b):
    return -(-a // b)


def fold_residual_into_weight(w, k):
    """Fold the broadcast residual x[..., None] into the Linear weight.

    out[m, d*K + j] = sum_c x[m, c] * w[c, d*K + j] + b[d*K + j] + x[m, d]
    so add 1.0 at w[d, d*K + j] for every j in [0, K).  Call once per set of
    weights and reuse the result for every forward call (hoisted fold).
    """
    d = w.shape[0]
    residual = jnp.repeat(jnp.eye(d, dtype=jnp.float32), k, axis=1)
    return w.astype(jnp.float32) + residual


def _vmem_budget_and_limit():
    """Per-generation VMEM tile budget and the Mosaic scoped-VMEM limit."""
    try:
        kind = jax.devices()[0].device_kind.lower()
    except Exception:
        kind = ""
    if "v5 lite" in kind or "v5lite" in kind or "v5e" in kind:
        budget = 12 << 20      # v5e default scoped-VMEM limit is only 16 MiB
    elif "v6" in kind:
        budget = 80 << 20      # 128 MiB physical VMEM
    elif "v7" in kind or "7x" in kind:
        budget = 40 << 20      # 64 MiB physical VMEM per TensorCore
    else:
        budget = 24 << 20
    limit = min(budget + (8 << 20), 120 << 20)
    return budget, limit


def _unpacked_residual_kernel(x_ref, w_ref, b_ref, o_ref):
    # Pure matmul + bias: the broadcast residual was folded into w_ref on the
    # host, so it rides the f32 MXU accumulation for free (no cross-lane
    # broadcast/reshape relayout in the body).
    h = jnp.dot(
        x_ref[...],
        w_ref[...],
        precision=lax.Precision.HIGHEST,
        preferred_element_type=jnp.float32,
    )
    o_ref[...] = (h + b_ref[...]).astype(o_ref.dtype)


def unpacked_residual(x, w, b, *, w_fused=None, out_dtype=None, tm_target=512,
                      vmem_budget_bytes=None, vmem_limit_bytes=None):
    """UnpackedResidual around a Linear(D -> D*K) 'unpack' module.

    x: (B, S, D); w: (D, D*K); b: (D*K,)  ->  (B, S, D, K)
    Computes reshape(x @ w + b, (B, S, D, K)) + x[..., None] in one fused pass.
    Pass out_dtype=jnp.bfloat16 to halve the dominant HBM write stream (the
    matmul still accumulates in f32; only the final store is cast).
    """
    B, S, D = x.shape
    DK = w.shape[1]
    K = DK // D
    assert D * K == DK, "w must have shape (D, D*K)"
    M = B * S

    out_dtype = jnp.dtype(x.dtype if out_dtype is None else out_dtype)
    out_bytes = out_dtype.itemsize
    sublane = max(8, 32 // out_bytes)        # 8 for f32 tiles, 16 for bf16

    if w_fused is None:                      # prefer hoisting this to call-site
        w_fused = fold_residual_into_weight(w, K)
    w_fused = w_fused.astype(jnp.float32)

    if vmem_budget_bytes is None or vmem_limit_bytes is None:
        dbudget, dlimit = _vmem_budget_and_limit()
        vmem_budget_bytes = dbudget if vmem_budget_bytes is None else vmem_budget_bytes
        vmem_limit_bytes = dlimit if vmem_limit_bytes is None else vmem_limit_bytes

    # ---- row tiling: balance tile sizes against M so padding waste is at
    # most one sublane group instead of up to tm-1 all-zero rows.
    tm_target = max(sublane, min(tm_target, _round_up(M, sublane)))
    tm = _round_up(_cdiv(M, _cdiv(M, tm_target)), sublane)

    # ---- lane (D*K) tile candidates: multiples of 128, or the full width.
    if DK % 128 == 0:
        tn_cands = [c for c in range(DK, 0, -128) if DK % c == 0]
    else:
        tn_cands = [DK]

    def _tile_bytes(tm_, tn_):
        # double-buffered x / w / bias input tiles + double-buffered out tile
        return (2 * tm_ * D * 4 + 2 * D * tn_ * 4 + 2 * tn_ * 4
                + 2 * tm_ * tn_ * out_bytes)

    # Joint tm/tn shrink: if even the narrowest lane tile blows the budget,
    # halve tm first (prevents VMEM over-subscription for large D).
    while tm > sublane and _tile_bytes(tm, tn_cands[-1]) > vmem_budget_bytes:
        tm = max(sublane, _round_up(tm // 2, sublane))
    tn = next((c for c in tn_cands if _tile_bytes(tm, c) <= vmem_budget_bytes),
              tn_cands[-1])

    m_pad = _round_up(M, tm)
    m_tiles = m_pad // tm
    n_tiles = DK // tn

    # ---- grid ordering: minimise re-streamed HBM bytes.  Mosaic shards the
    # leading "parallel" axis across TensorCores, so the outer axis is also
    # the megacore-sharded one.
    w_stream = D * DK * 4
    x_stream = m_pad * D * 4
    cost_lane_outer = w_stream + n_tiles * x_stream   # each W tile DMA'd once
    cost_row_outer = m_tiles * w_stream + x_stream    # each X tile DMA'd once
    lane_outer = n_tiles > 1 and cost_lane_outer <= cost_row_outer

    if lane_outer:
        # Weight-stationary: fused-W column tiles are fetched exactly once and
        # the lane axis is split across cores -> distinct W columns per core.
        grid = (n_tiles, m_tiles)
        x_map = lambda j, i: (i, 0)
        w_map = lambda j, i: (0, j)
        o_map = lambda j, i: (i, j)
    else:
        # Activation-stationary: the x row tile stays resident across lanes.
        grid = (m_tiles, n_tiles)
        x_map = lambda i, j: (i, 0)
        w_map = lambda i, j: (0, j)
        o_map = lambda i, j: (i, j)
    dim_sem = ("parallel", "arbitrary")   # parallel axis must be outermost

    x2 = x.reshape(M, D).astype(jnp.float32)
    if m_pad != M:
        x2 = jnp.pad(x2, ((0, m_pad - M), (0, 0)))
    b2 = b.reshape(1, DK).astype(jnp.float32)

    out = pl.pallas_call(
        _unpacked_residual_kernel,
        out_shape=jax.ShapeDtypeStruct((m_pad, DK), out_dtype),
        grid_spec=pltpu.PrefetchScalarGridSpec(
            num_scalar_prefetch=0,
            grid=grid,
            in_specs=[
                pl.BlockSpec((tm, D), x_map),   # activation row tile
                pl.BlockSpec((D, tn), w_map),   # fused weight column tile
                pl.BlockSpec((1, tn), w_map),   # bias column tile
            ],
            out_specs=pl.BlockSpec((tm, tn), o_map),
        ),
        compiler_params=pltpu.CompilerParams(
            dimension_semantics=dim_sem,
            vmem_limit_bytes=vmem_limit_bytes,
        ),
    )(x2, w_fused, b2)

    if m_pad != M:
        out = out[:M]
    return out.reshape(B, S, D, K)


if __name__ == "__main__":
    # Small shapes consistent with the forward: x (B, S, D); unpack factor K.
    B, S, D, K = 2, 8, 32, 4

    key = jax.random.PRNGKey(0)
    kx, kw, kb = jax.random.split(key, 3)

    x = jax.random.normal(kx, (B, S, D), dtype=jnp.float32)
    # Deterministic Linear(D, D*K) parameters (synthetic init, no checkpoint).
    w = jax.random.normal(kw, (D, D * K), dtype=jnp.float32) * (1.0 / jnp.sqrt(D))
    b = jax.random.normal(kb, (D * K,), dtype=jnp.float32) * 0.01

    # Hoisted once ("module init" time): residual folded into the weight.
    w_fused = jax.block_until_ready(fold_residual_into_weight(w, K))

    # Pure-JAX reference of the PyTorch semantics: h = module(x); h + x[..., None]
    h_ref = (
        jnp.dot(x.reshape(B * S, D), w, precision=lax.Precision.HIGHEST) + b
    ).reshape(B, S, D, K)
    ref = h_ref + x[..., None]

    # f32 output (matches the module dtype exactly).
    out = jax.block_until_ready(unpacked_residual(x, w, b, w_fused=w_fused))
    assert out.shape == (B, S, D, K)
    assert out.dtype == jnp.float32
    assert jnp.allclose(out, ref, atol=1e-4, rtol=1e-4), "f32 mismatch vs reference"

    # bf16 output path: halves the dominant HBM write stream of this
    # memory-bound kernel; accumulation stays f32, only the final store casts.
    out_bf16 = jax.block_until_ready(
        unpacked_residual(x, w, b, w_fused=w_fused, out_dtype=jnp.bfloat16))
    assert out_bf16.dtype == jnp.bfloat16
    assert jnp.allclose(out_bf16.astype(jnp.float32), ref, atol=3e-2, rtol=3e-2), \
        "bf16 mismatch vs reference"

    print("KERNEL_OK")
</pallas_src>

<mosaic_0001>
module attributes {stable_mosaic.version = 11 : i64} {
  func.func @_unpacked_residual_kernel(%arg0: i32, %arg1: i32, %arg2: memref<16x32xf32, #tpu.memory_space<vmem>>, %arg3: memref<32x128xf32, #tpu.memory_space<vmem>>, %arg4: memref<1x128xf32, #tpu.memory_space<vmem>>, %arg5: memref<16x128xf32, #tpu.memory_space<vmem>>) attributes {dimension_semantics = [#tpu.dimension_semantics<parallel>, #tpu.dimension_semantics<arbitrary>], iteration_bounds = array<i64: 1, 1>, scalar_prefetch = 0 : i64, scratch_operands = 0 : i64, tpu.core_type = #tpu.core_type<tc>, window_params = [{transform_indices = @transform_0, window_bounds = array<i64: 16, 32>}, {transform_indices = @transform_1, window_bounds = array<i64: 32, 128>}, {transform_indices = @transform_2, window_bounds = array<i64: 1, 128>}, {transform_indices = @transform_3, window_bounds = array<i64: 16, 128>}]} {
    %c0 = arith.constant 0 : index
    %c0_0 = arith.constant 0 : index
    %0 = vector.load %arg2[%c0, %c0_0] : memref<16x32xf32, #tpu.memory_space<vmem>>, vector<16x32xf32>
    %c0_1 = arith.constant 0 : index
    %c0_2 = arith.constant 0 : index
    %1 = vector.load %arg3[%c0_1, %c0_2] : memref<32x128xf32, #tpu.memory_space<vmem>>, vector<32x128xf32>
    %cst = arith.constant dense<0.000000e+00> : vector<16x128xf32>
    %2 = tpu.matmul %0, %1, %cst {dimension_numbers = #tpu.dot_dimension_numbers<[1], [0], [0], [1], [0, 0, 1, 1], [], []>, precision = #tpu.contract_precision<fp32>} : vector<16x32xf32>, vector<32x128xf32>, vector<16x128xf32> -> vector<16x128xf32>
    %c0_3 = arith.constant 0 : index
    %c0_4 = arith.constant 0 : index
    %3 = vector.load %arg4[%c0_3, %c0_4] : memref<1x128xf32, #tpu.memory_space<vmem>>, vector<1x128xf32>
    %4 = vector.broadcast %3 : vector<1x128xf32> to vector<16x128xf32>
    %5 = arith.addf %2, %4 : vector<16x128xf32>
    %c0_5 = arith.constant 0 : index
    %c0_6 = arith.constant 0 : index
    %6 = vector.load %arg5[%c0_5, %c0_6] : memref<16x128xf32, #tpu.memory_space<vmem>>, vector<16x128xf32>
    tpu.vector_store %arg5[%c0_5, %c0_6], %5 {strides = array<i32>} : memref<16x128xf32, #tpu.memory_space<vmem>>, vector<16x128xf32>,
    return
  }
  func.func @transform_0(%arg0: i32, %arg1: i32) -> (i32, i32) {
    %c0_i32 = arith.constant 0 : i32
    %c0_i32_0 = arith.constant 0 : i32
    return %arg0, %c0_i32 : i32, i32
  }
  func.func @transform_1(%arg0: i32, %arg1: i32) -> (i32, i32) {
    %c0_i32 = arith.constant 0 : i32
    %c0_i32_0 = arith.constant 0 : i32
    return %c0_i32, %arg1 : i32, i32
  }
  func.func @transform_2(%arg0: i32, %arg1: i32) -> (i32, i32) {
    %c0_i32 = arith.constant 0 : i32
    %c0_i32_0 = arith.constant 0 : i32
    return %c0_i32, %arg1 : i32, i32
  }
  func.func @transform_3(%arg0: i32, %arg1: i32) -> (i32, i32) {
    %c0_i32 = arith.constant 0 : i32
    return %arg0, %arg1 : i32, i32
  }
}

</mosaic_0001>

<llo_original>
// kernel: tpu_custom_call.1
$region0: #{tpu_custom_call.1}
  #allocation0 [shape = 'u32[]', space=smem, size = 0x4, offset = 0x4, fixed_abs, tag = 'smem constant byte address 0x4 - core index']
  #allocation1 [shape = 'u32[72,128]{1,0:T(1,128)}', space=vmem, size = 0x9000, scoped, tag = 'internal scratch']
  %s0 = inlined_call_operand.hbm [shape: f32[16,32], index: 0, kind: input, shape index: {}]
  %s1 = inlined_call_operand.hbm [shape: f32[32,128], index: 1, kind: input, shape index: {}]
  %s2 = inlined_call_operand.vmem [shape: f32[1,128], index: 2, kind: input, shape index: {}]
  %s3 = inlined_call_operand.hbm [shape: f32[16,128], index: 3, kind: output, shape index: {}]
  %s4 = sld [smem:[#allocation0]]
  $region30: #{tpu_custom_call.1} parent=0
    _
  %s6 = ssub.s32 1, %s4
  %s7 = scalar_select 0, %s6, %s4
  $region1: #{tpu_custom_call.1} parent=0
    #allocation2 [shape = 'u8[8192]{0}', space=vmem, size = 0x2000, scoped, tag = 'input window, operand 0, single buffered']
    #allocation3 [shape = 's32[1]{0}', space=sflag, size = 0x4, scoped, tag = 'scoped memory for tpu_custom_call.1']
    #allocation4 [shape = 's32[1]{0}', space=sflag, size = 0x4, scoped, tag = 'scoped memory for tpu_custom_call.1']
    #allocation5 [shape = 'u8[16384]{0}', space=vmem, size = 0x4000, scoped, tag = 'input window, operand 1, single buffered']
    #allocation6 [shape = 's32[1]{0}', space=sflag, size = 0x4, scoped, tag = 'scoped memory for tpu_custom_call.1']
    #allocation7 [shape = 'u8[8192]{0}', space=vmem, size = 0x2000, scoped, tag = 'output window, operand 0, single buffered']
    %8 = vsyncpa [#allocation3], 0
    %9 = vsyncpa [#allocation6], 0
    %10 = vsyncpa [#allocation4], 0
    // Predicated region
    $region2: #{tpu_custom_call.1} parent=1 // pred_check
      _
    $region3: #{tpu_custom_call.1} parent=1 // pred_check_branch
      %12 = sbr.rel (0) target = $region5
    $region4: #{tpu_custom_call.1} parent=1 // pred_region
      %14 = vsyncadd [#allocation3], 0
      %s15 = sshll.u32 %s0, 4
      %s16 = int_to_ptr.hbm [resolvable:$true] %s15
      %s17 = sshll.u32 [#allocation2], 4
      %s18 = int_to_ptr.vmem [resolvable:$true] %s17
      %23 = dma.hbm_to_vmem [thread:$0]  %s16, 256, %s18, [#allocation3], 128, 128, 8
    $region5: #{tpu_custom_call.1} parent=1 // pred_fallthru
      _
    // Predicated region
    $region6: #{tpu_custom_call.1} parent=1 // pred_check
      _
    $region7: #{tpu_custom_call.1} parent=1 // pred_check_branch
      %25 = sbr.rel (0) target = $region9
    $region8: #{tpu_custom_call.1} parent=1 // pred_region
      %27 = vsyncadd [#allocation6], 0
      %s28 = sshll.u32 %s1, 4
      %s29 = int_to_ptr.hbm [resolvable:$true] %s28
      %s30 = sshll.u32 [#allocation5], 4
      %s31 = int_to_ptr.vmem [resolvable:$true] %s30
      %36 = dma.hbm_to_vmem [thread:$0]  %s29, 512, %s31, [#allocation6], 128, 128, 8
    $region9: #{tpu_custom_call.1} parent=1 // pred_fallthru
      _
    // Predicated region
    $region10: #{tpu_custom_call.1} parent=1 // pred_check
      _
    $region11: #{tpu_custom_call.1} parent=1 // pred_check_branch
      %38 = sbr.rel (0) target = $region13
    $region12: #{tpu_custom_call.1} parent=1 // pred_region
      _
    $region13: #{tpu_custom_call.1} parent=1 // pred_fallthru
      _
    // Predicated region
    $region14: #{tpu_custom_call.1} parent=1 // pred_check
      _
    $region15: #{tpu_custom_call.1} parent=1 // pred_check_branch
      %40 = sbr.rel (0) target = $region17
    $region16: #{tpu_custom_call.1} parent=1 // pred_region
      %42 = dma.done [#allocation3], 256
    $region17: #{tpu_custom_call.1} parent=1 // pred_fallthru
      _
    // Predicated region
    $region18: #{tpu_custom_call.1} parent=1 // pred_check
      _
    $region19: #{tpu_custom_call.1} parent=1 // pred_check_branch
      %44 = sbr.rel (0) target = $region21
    $region20: #{tpu_custom_call.1} parent=1 // pred_region
      %46 = dma.done [#allocation6], 512
    $region21: #{tpu_custom_call.1} parent=1 // pred_fallthru
      _
    %v47 = vld [vmem:[#allocation2] sm:$0xff]
    %v48 = vld [vmem:[#allocation2 + $0x8] sm:$0xff]
    %v49 = vld [vmem:[#allocation5] sm:$0xff]
    %v50 = vld [vmem:[#allocation5 + $0x8] sm:$0xff]
    %v51 = vld [vmem:[#allocation5 + $0x10] sm:$0xff]
    %v52 = vld [vmem:[#allocation5 + $0x18] sm:$0xff]
    %v53 = vld [vmem:[%s2] sm:$0x1]
    %v55 = vperm.slane %v53, 0
    %vm57 = vcmask 261120
    %v59 = vsel %vm57, %v47, 0
    %v62 = vsel %vm57, %v48, 0
    %64 = vmatpush.msra.mxu0 0.0
    %65 = vmatpush.msra.mxu0 0.0
    %66 = vmatpush.msra.mxu0 0.0
    %67 = vmatpush.msra.mxu0 0.0
    %68 = vmatpush.msra.mxu0 0.0
    %69 = vmatpush.msra.mxu0 0.0
    %70 = vmatpush.msra.mxu0 0.0
    %71 = vmatpush.msra.mxu0 0.0
    %72 = vmatpush.msra.mxu0 0.0
    %73 = vmatpush.msra.mxu0 0.0
    %74 = vmatpush.msra.mxu0 0.0
    %75 = vmatpush.msra.mxu0 0.0
    %v76 = vand.u32 %v52, 4294901760
    %77 = vmatpush.msra.mxu0 %v76
    %v78 = vand.u32 %v51, 4294901760
    %79 = vmatpush.msra.mxu0 %v78
    %v80 = vand.u32 %v50, 4294901760
    %81 = vmatpush.msra.mxu0 %v80
    %v82 = vand.u32 %v49, 4294901760
    %83 = vmatpush.msra.mxu0 %v82
    %v84 = vand.u32 %v59, 4294901760
    %v85 = vsub.f32 %v59, %v84
    %v86 = vand.u32 %v85, 4294901760
    %v87 = vsub.f32 %v85, %v86
    %v88 = vand.u32 %v87, 4294901760
    %89 = vmatmul.f32.gmra.mxu0 %v88
    %v90 = vpop.f32.mrf.mxu0
    %v91 = vadd.f32 %v55, %v90
    %v92 = vand.u32 %v62, 4294901760
    %v93 = vsub.f32 %v62, %v92
    %v94 = vand.u32 %v93, 4294901760
    %v95 = vsub.f32 %v93, %v94
    %v96 = vand.u32 %v95, 4294901760
    %97 = vmatmul.f32.gmra.mxu0 %v96
    %v98 = vpop.f32.mrf.mxu0
    %v99 = vadd.f32 %v55, %v98
    %100 = vdwg.mxu0
    %101 = vmatpush.msra.mxu0 0.0
    %102 = vmatpush.msra.mxu0 0.0
    %103 = vmatpush.msra.mxu0 0.0
    %104 = vmatpush.msra.mxu0 0.0
    %105 = vmatpush.msra.mxu0 0.0
    %106 = vmatpush.msra.mxu0 0.0
    %107 = vmatpush.msra.mxu0 0.0
    %108 = vmatpush.msra.mxu0 0.0
    %109 = vmatpush.msra.mxu0 0.0
    %110 = vmatpush.msra.mxu0 0.0
    %111 = vmatpush.msra.mxu0 0.0
    %112 = vmatpush.msra.mxu0 0.0
    %v113 = vand.u32 %v52, 4294901760
    %v114 = vsub.f32 %v52, %v113
    %v115 = vand.u32 %v114, 4294901760
    %v116 = vsub.f32 %v114, %v115
    %v117 = vand.u32 %v116, 4294901760
    %118 = vmatpush.msra.mxu0 %v117
    %v119 = vand.u32 %v51, 4294901760
    %v120 = vsub.f32 %v51, %v119
    %v121 = vand.u32 %v120, 4294901760
    %v122 = vsub.f32 %v120, %v121
    %v123 = vand.u32 %v122, 4294901760
    %124 = vmatpush.msra.mxu0 %v123
    %v125 = vand.u32 %v50, 4294901760
    %v126 = vsub.f32 %v50, %v125
    %v127 = vand.u32 %v126, 4294901760
    %v128 = vsub.f32 %v126, %v127
    %v129 = vand.u32 %v128, 4294901760
    %130 = vmatpush.msra.mxu0 %v129
    %v131 = vand.u32 %v49, 4294901760
    %v132 = vsub.f32 %v49, %v131
    %v133 = vand.u32 %v132, 4294901760
    %v134 = vsub.f32 %v132, %v133
    %v135 = vand.u32 %v134, 4294901760
    %136 = vmatpush.msra.mxu0 %v135
    %v137 = vand.u32 %v59, 4294901760
    %138 = vmatmul.f32.gmra.mxu0 %v137
    %v139 = vpop.f32.mrf.mxu0
    %v140 = vadd.f32 %v91, %v139
    %v141 = vand.u32 %v62, 4294901760
    %142 = vmatmul.f32.gmra.mxu0 %v141
    %v143 = vpop.f32.mrf.mxu0
    %v144 = vadd.f32 %v99, %v143
    %145 = vdwg.mxu0
    %146 = vmatpush.msra.mxu0 0.0
    %147 = vmatpush.msra.mxu0 0.0
    %148 = vmatpush.msra.mxu0 0.0
    %149 = vmatpush.msra.mxu0 0.0
    %150 = vmatpush.msra.mxu0 0.0
    %151 = vmatpush.msra.mxu0 0.0
    %152 = vmatpush.msra.mxu0 0.0
    %153 = vmatpush.msra.mxu0 0.0
    %154 = vmatpush.msra.mxu0 0.0
    %155 = vmatpush.msra.mxu0 0.0
    %156 = vmatpush.msra.mxu0 0.0
    %157 = vmatpush.msra.mxu0 0.0
    %v158 = vand.u32 %v52, 4294901760
    %v159 = vsub.f32 %v52, %v158
    %160 = vmatpush.msra.mxu0 %v159
    %v161 = vand.u32 %v51, 4294901760
    %v162 = vsub.f32 %v51, %v161
    %163 = vmatpush.msra.mxu0 %v162
    %v164 = vand.u32 %v50, 4294901760
    %v165 = vsub.f32 %v50, %v164
    %166 = vmatpush.msra.mxu0 %v165
    %v167 = vand.u32 %v49, 4294901760
    %v168 = vsub.f32 %v49, %v167
    %169 = vmatpush.msra.mxu0 %v168
    %v170 = vand.u32 %v59, 4294901760
    %v171 = vsub.f32 %v59, %v170
    %172 = vmatmul.f32.gmra.mxu0 %v171
    %v173 = vpop.f32.mrf.mxu0
    %v174 = vadd.f32 %v140, %v173
    %v175 = vand.u32 %v62, 4294901760
    %v176 = vsub.f32 %v62, %v175
    %177 = vmatmul.f32.gmra.mxu0 %v176
    %v178 = vpop.f32.mrf.mxu0
    %v179 = vadd.f32 %v144, %v178
    %180 = vdwg.mxu0
    %181 = vmatpush.msra.mxu0 0.0
    %182 = vmatpush.msra.mxu0 0.0
    %183 = vmatpush.msra.mxu0 0.0
    %184 = vmatpush.msra.mxu0 0.0
    %185 = vmatpush.msra.mxu0 0.0
    %186 = vmatpush.msra.mxu0 0.0
    %187 = vmatpush.msra.mxu0 0.0
    %188 = vmatpush.msra.mxu0 0.0
    %189 = vmatpush.msra.mxu0 0.0
    %190 = vmatpush.msra.mxu0 0.0
    %191 = vmatpush.msra.mxu0 0.0
    %192 = vmatpush.msra.mxu0 0.0
    %v193 = vand.u32 %v52, 4294901760
    %194 = vmatpush.msra.mxu0 %v193
    %v195 = vand.u32 %v51, 4294901760
    %196 = vmatpush.msra.mxu0 %v195
    %v197 = vand.u32 %v50, 4294901760
    %198 = vmatpush.msra.mxu0 %v197
    %v199 = vand.u32 %v49, 4294901760
    %200 = vmatpush.msra.mxu0 %v199
    %v201 = vand.u32 %v59, 4294901760
    %v202 = vsub.f32 %v59, %v201
    %v203 = vand.u32 %v202, 4294901760
    %204 = vmatmul.f32.gmra.mxu0 %v203
    %v205 = vpop.f32.mrf.mxu0
    %v206 = vadd.f32 %v174, %v205
    %v207 = vand.u32 %v62, 4294901760
    %v208 = vsub.f32 %v62, %v207
    %v209 = vand.u32 %v208, 4294901760
    %210 = vmatmul.f32.gmra.mxu0 %v209
    %v211 = vpop.f32.mrf.mxu0
    %v212 = vadd.f32 %v179, %v211
    %213 = vdwg.mxu0
    %214 = vmatpush.msra.mxu0 0.0
    %215 = vmatpush.msra.mxu0 0.0
    %216 = vmatpush.msra.mxu0 0.0
    %217 = vmatpush.msra.mxu0 0.0
    %218 = vmatpush.msra.mxu0 0.0
    %219 = vmatpush.msra.mxu0 0.0
    %220 = vmatpush.msra.mxu0 0.0
    %221 = vmatpush.msra.mxu0 0.0
    %222 = vmatpush.msra.mxu0 0.0
    %223 = vmatpush.msra.mxu0 0.0
    %224 = vmatpush.msra.mxu0 0.0
    %225 = vmatpush.msra.mxu0 0.0
    %v226 = vand.u32 %v52, 4294901760
    %v227 = vsub.f32 %v52, %v226
    %v228 = vand.u32 %v227, 4294901760
    %229 = vmatpush.msra.mxu0 %v228
    %v230 = vand.u32 %v51, 4294901760
    %v231 = vsub.f32 %v51, %v230
    %v232 = vand.u32 %v231, 4294901760
    %233 = vmatpush.msra.mxu0 %v232
    %v234 = vand.u32 %v50, 4294901760
    %v235 = vsub.f32 %v50, %v234
    %v236 = vand.u32 %v235, 4294901760
    %237 = vmatpush.msra.mxu0 %v236
    %v238 = vand.u32 %v49, 4294901760
    %v239 = vsub.f32 %v49, %v238
    %v240 = vand.u32 %v239, 4294901760
    %241 = vmatpush.msra.mxu0 %v240
    %v242 = vand.u32 %v59, 4294901760
    %243 = vmatmul.f32.gmra.mxu0 %v242
    %v244 = vpop.f32.mrf.mxu0
    %v245 = vadd.f32 %v206, %v244
    %v246 = vand.u32 %v62, 4294901760
    %247 = vmatmul.f32.gmra.mxu0 %v246
    %v248 = vpop.f32.mrf.mxu0
    %v249 = vadd.f32 %v212, %v248
    %250 = vdwg.mxu0
    %251 = vmatpush.msra.mxu0 0.0
    %252 = vmatpush.msra.mxu0 0.0
    %253 = vmatpush.msra.mxu0 0.0
    %254 = vmatpush.msra.mxu0 0.0
    %255 = vmatpush.msra.mxu0 0.0
    %256 = vmatpush.msra.mxu0 0.0
    %257 = vmatpush.msra.mxu0 0.0
    %258 = vmatpush.msra.mxu0 0.0
    %259 = vmatpush.msra.mxu0 0.0
    %260 = vmatpush.msra.mxu0 0.0
    %261 = vmatpush.msra.mxu0 0.0
    %262 = vmatpush.msra.mxu0 0.0
    %v263 = vand.u32 %v52, 4294901760
    %264 = vmatpush.msra.mxu0 %v263
    %v265 = vand.u32 %v51, 4294901760
    %266 = vmatpush.msra.mxu0 %v265
    %v267 = vand.u32 %v50, 4294901760
    %268 = vmatpush.msra.mxu0 %v267
    %v269 = vand.u32 %v49, 4294901760
    %270 = vmatpush.msra.mxu0 %v269
    %v271 = vand.u32 %v59, 4294901760
    %272 = vmatmul.f32.gmra.mxu0 %v271
    %v273 = vpop.f32.mrf.mxu0
    %v274 = vadd.f32 %v245, %v273
    %v275 = vand.u32 %v62, 4294901760
    %276 = vmatmul.f32.gmra.mxu0 %v275
    %v277 = vpop.f32.mrf.mxu0
    %v278 = vadd.f32 %v249, %v277
    %279 = vdwg.mxu0
    %280 = vst [vmem:[#allocation7] sm:$0xff] %v274
    %281 = vst [vmem:[#allocation7 + $0x8] sm:$0xff] %v278
    // Predicated region
    $region22: #{tpu_custom_call.1} parent=1 // pred_check
      _
    $region23: #{tpu_custom_call.1} parent=1 // pred_check_branch
      %283 = sbr.rel (0) target = $region25
    $region24: #{tpu_custom_call.1} parent=1 // pred_region
      %285 = vsyncadd [#allocation4], 0
      %s286 = sshll.u32 [#allocation7], 4
      %s287 = int_to_ptr.vmem [resolvable:$true] %s286
      %s288 = sshll.u32 %s3, 4
      %s289 = int_to_ptr.hbm [resolvable:$true] %s288
      %294 = dma.vmem_to_hbm [thread:$0]  %s287, 256, %s289, [#allocation4], 128, 128, 8
    $region25: #{tpu_custom_call.1} parent=1 // pred_fallthru
      _
    // Predicated region
    $region26: #{tpu_custom_call.1} parent=1 // pred_check
      _
    $region27: #{tpu_custom_call.1} parent=1 // pred_check_branch
      %296 = sbr.rel (0) target = $region29
    $region28: #{tpu_custom_call.1} parent=1 // pred_region
      %298 = dma.done [#allocation4], 256
    $region29: #{tpu_custom_call.1} parent=1 // pred_fallthru
      _
    %299 = vsyncpa [#allocation3], 1
    %300 = vsyncpa [#allocation6], 1
    %301 = vsyncpa [#allocation4], 1

</llo_original>
